<compile_context>
chip_gen: v6e
topology: v6e:2x2x1
jax: 0.10.0
libtpu: 0.0.40
codegen_flags: <defaults>
</compile_context>

<pallas_src>
import jax
import jax.numpy as jnp
from jax.experimental import pallas as pl
from jax.experimental.pallas import tpu as pltpu


def _conv1x1_silu_kernel(x_ref, w_ref, b_ref, o_ref):
    """One (batch, pixel-tile) grid step.

    x_ref : (C_in, TP)  input pixels — channels on sublanes, pixels on lanes
    w_ref : (C4,  C_in) 1x1-conv weight
    b_ref : (C4,  1)    bias
    o_ref : (C4,  TP)   SiLU(conv) output (lane-dense)
    """
    x = x_ref[...]                      # (C_in, TP) f32
    w = w_ref[...]                      # (C4, C_in) f32
    c_in = x.shape[0]

    if c_in <= 8:
        # Tiny contraction: unrolled VPU multiply-accumulate (no MXU round trip).
        acc = w[:, 0:1] * x[0:1, :]                      # (C4,1)*(1,TP) -> (C4,TP)
        for k in range(1, c_in):
            acc = acc + w[:, k:k + 1] * x[k:k + 1, :]
    else:
        acc = jnp.dot(w, x, preferred_element_type=jnp.float32)

    y = acc + b_ref[...]                # bias broadcast over lanes
    o_ref[...] = (y * jax.nn.sigmoid(y)).astype(o_ref.dtype)   # SiLU


def _round_up(v, m):
    return (v + m - 1) // m * m


def _fixed_vmem_bytes(c_in, c4):
    """Double-buffered, tile-padded VMEM footprint of weight + bias blocks."""
    c4_p = _round_up(c4, 8)
    return 2 * (c4_p * _round_up(c_in, 128) + c4_p * 128) * 4


def _pick_pixel_tile(hw, c_in, c4, *, max_tp=2048, vmem_budget=12 * 1024 * 1024):
    """Pick a lane-dense pixel-tile size that fits a double-buffered VMEM budget.

    Returns (tile, padded_hw). Padding is only used as a last resort.
    """
    c_in_p = _round_up(c_in, 8)
    c4_p = _round_up(c4, 8)
    tile_budget = max(vmem_budget - _fixed_vmem_bytes(c_in, c4), 2 * 1024 * 1024)
    bytes_per_128 = 2 * (c_in_p + c4_p) * 128 * 4        # in+out, double-buffered
    cap = max(128, min(max_tp, (tile_budget // bytes_per_128) * 128))
    if hw <= cap:
        return hw, hw                                    # single full tile, no pad
    for tp in range(cap, 127, -128):                     # multiples of 128
        if hw % tp == 0:
            return tp, hw                                # even tiling, no pad
    tp = min(cap, 512)                                   # rare ragged fallback
    return tp, pl.cdiv(hw, tp) * tp


def _vmem_limit_bytes(c_in, c4, tp):
    c_in_p = _round_up(c_in, 8)
    c4_p = _round_up(c4, 8)
    tp_p = _round_up(tp, 128)
    need = 2 * (c_in_p + c4_p) * tp_p * 4 + _fixed_vmem_bytes(c_in, c4) + (1 << 20)
    return int(min(32 * 1024 * 1024, max(4 * 1024 * 1024, need)))


def conv1x1_silu_channels_first(x_flat, w_mat, bias):
    """x_flat: (B, C_in, HW) f32, w_mat: (C4, C_in), bias: (C4, 1) -> (B, C4, HW)."""
    B, C_in, HW = x_flat.shape
    C4 = w_mat.shape[0]

    tp, hw_pad = _pick_pixel_tile(HW, C_in, C4)
    if hw_pad != HW:
        x_flat = jnp.pad(x_flat, ((0, 0), (0, 0), (0, hw_pad - HW)))
    n_tiles = hw_pad // tp

    cost = pl.CostEstimate(
        flops=int(2 * B * C4 * C_in * hw_pad + 4 * B * C4 * hw_pad),
        transcendentals=int(B * C4 * hw_pad),
        bytes_accessed=int(4 * (B * C_in * hw_pad + B * C4 * hw_pad
                                + C4 * C_in + C4)),
    )

    y_flat = pl.pallas_call(
        _conv1x1_silu_kernel,
        out_shape=jax.ShapeDtypeStruct((B, C4, hw_pad), jnp.float32),
        grid_spec=pltpu.PrefetchScalarGridSpec(
            num_scalar_prefetch=0,
            grid=(B, n_tiles),
            in_specs=[
                pl.BlockSpec((None, C_in, tp), lambda b, p: (b, 0, p)),  # x tile
                pl.BlockSpec((C4, C_in), lambda b, p: (0, 0)),           # weight
                pl.BlockSpec((C4, 1), lambda b, p: (0, 0)),              # bias
            ],
            out_specs=pl.BlockSpec((None, C4, tp), lambda b, p: (b, 0, p)),
        ),
        compiler_params=pltpu.CompilerParams(
            dimension_semantics=("parallel", "parallel"),
            vmem_limit_bytes=_vmem_limit_bytes(C_in, C4, tp)),
        cost_estimate=cost,
    )(x_flat, w_mat, bias)

    if hw_pad != HW:
        y_flat = y_flat[:, :, :HW]
    return y_flat


def pixel_shuffle_upsample(x_nchw, w_conv, b_conv):
    """Forward of PixelShuffleUpsample.

    x_nchw : (B, C_in, H, W) float32
    w_conv : (4*C_out, C_in, 1, 1) float32   (PyTorch conv weight layout)
    b_conv : (4*C_out,) float32
    returns: (B, C_out, 2H, 2W) float32
    """
    B, C_in, H, W = x_nchw.shape
    C4 = w_conv.shape[0]
    assert C4 % 4 == 0
    C_out = C4 // 4
    HW = H * W

    # NCHW is already channels-major: flattening the spatial dims is free.
    x_flat = x_nchw.reshape(B, C_in, HW)

    # 1x1 conv weight -> (C4, C_in) matmul weight; bias -> (C4, 1).
    w_mat = w_conv[:, :, 0, 0]
    bias = b_conv.reshape(C4, 1)

    # Hot path: channels-first matmul + bias + SiLU in the Pallas kernel.
    y_flat = conv1x1_silu_channels_first(x_flat, w_mat, bias)   # (B, C4, HW)

    # PixelShuffle(2), matching PyTorch NCHW semantics:
    # out[b, c, 2h+r, 2w+s] = y[b, 4c + 2r + s, h, w]
    y = y_flat.reshape(B, C_out, 2, 2, H, W)
    y = jnp.transpose(y, (0, 1, 4, 2, 5, 3))                    # (B, C_out, H, r, W, s)
    return y.reshape(B, C_out, 2 * H, 2 * W)


def init_params(key, dim, dim_out=None):
    """Deterministic init mirroring PixelShuffleUpsample.init_conv_."""
    dim_out = dim if dim_out is None else dim_out
    fan_in = dim * 1 * 1
    bound = jnp.sqrt(6.0 / fan_in)            # kaiming_uniform_, a=0, fan_in
    w_base = jax.random.uniform(
        key, (dim_out, dim, 1, 1), minval=-bound, maxval=bound,
        dtype=jnp.float32)
    # repeat 'o ... -> (o 4) ...' : each base filter appears 4x consecutively
    w_conv = jnp.repeat(w_base, 4, axis=0)    # (4*dim_out, dim, 1, 1)
    b_conv = jnp.zeros((4 * dim_out,), jnp.float32)
    return w_conv, b_conv


def _reference(x_nchw, w_conv, b_conv):
    """Plain-JAX reference for sanity checking."""
    B, C_in, H, W = x_nchw.shape
    C4 = w_conv.shape[0]
    C_out = C4 // 4
    w = w_conv[:, :, 0, 0]                                     # (C4, C_in)
    y = jnp.einsum('bchw,oc->bohw', x_nchw, w) + b_conv[None, :, None, None]
    y = y * jax.nn.sigmoid(y)
    y = y.reshape(B, C_out, 2, 2, H, W)
    y = jnp.transpose(y, (0, 1, 4, 2, 5, 3))
    return y.reshape(B, C_out, 2 * H, 2 * W)


if __name__ == "__main__":
    key = jax.random.PRNGKey(0)
    k_x, k_w = jax.random.split(key)

    B, C, H, W = 2, 4, 16, 16
    dim, dim_out = C, C  # dim_out defaults to dim

    x = jax.random.normal(k_x, (B, C, H, W), dtype=jnp.float32)
    w_conv, b_conv = init_params(k_w, dim, dim_out)

    out = pixel_shuffle_upsample(x, w_conv, b_conv)
    out = jax.block_until_ready(out)

    ref = _reference(x, w_conv, b_conv)
    assert out.shape == (B, dim_out, 2 * H, 2 * W), out.shape
    assert jnp.allclose(out, ref, atol=1e-5, rtol=1e-5)

    print("KERNEL_OK")
</pallas_src>

<mosaic_0001>
module attributes {stable_mosaic.version = 11 : i64} {
  func.func @_conv1x1_silu_kernel(%arg0: i32, %arg1: i32, %arg2: memref<1x4x256xf32, #tpu.memory_space<vmem>>, %arg3: memref<16x4xf32, #tpu.memory_space<vmem>>, %arg4: memref<16x1xf32, #tpu.memory_space<vmem>>, %arg5: memref<1x16x256xf32, #tpu.memory_space<vmem>>) attributes {dimension_semantics = [#tpu.dimension_semantics<parallel>, #tpu.dimension_semantics<parallel>], iteration_bounds = array<i64: 2, 1>, scalar_prefetch = 0 : i64, scratch_operands = 0 : i64, tpu.core_type = #tpu.core_type<tc>, window_params = [{transform_indices = @transform_0, window_bounds = array<i64: 1, 4, 256>}, {pipeline_mode = #tpu.pipeline_mode<synchronous>, transform_indices = @transform_1, window_bounds = array<i64: 16, 4>}, {pipeline_mode = #tpu.pipeline_mode<synchronous>, transform_indices = @transform_2, window_bounds = array<i64: 16, 1>}, {transform_indices = @transform_3, window_bounds = array<i64: 1, 16, 256>}]} {
    %c0 = arith.constant 0 : index
    %c0_0 = arith.constant 0 : index
    %c0_1 = arith.constant 0 : index
    %0 = vector.load %arg2[%c0, %c0_0, %c0_1] : memref<1x4x256xf32, #tpu.memory_space<vmem>>, vector<1x4x256xf32>
    %1 = vector.shape_cast %0 : vector<1x4x256xf32> to vector<4x256xf32>
    %c0_2 = arith.constant 0 : index
    %c0_3 = arith.constant 0 : index
    %2 = vector.load %arg3[%c0_2, %c0_3] : memref<16x4xf32, #tpu.memory_space<vmem>>, vector<16x4xf32>
    %3 = vector.extract_strided_slice %2 {offsets = [0, 0], sizes = [16, 1], strides = [1, 1]} : vector<16x4xf32> to vector<16x1xf32>
    %4 = vector.extract_strided_slice %1 {offsets = [0, 0], sizes = [1, 256], strides = [1, 1]} : vector<4x256xf32> to vector<1x256xf32>
    %5 = vector.broadcast %3 : vector<16x1xf32> to vector<16x256xf32>
    %6 = vector.broadcast %4 : vector<1x256xf32> to vector<16x256xf32>
    %7 = arith.mulf %5, %6 : vector<16x256xf32>
    %8 = vector.extract_strided_slice %2 {offsets = [0, 1], sizes = [16, 1], strides = [1, 1]} : vector<16x4xf32> to vector<16x1xf32>
    %9 = vector.extract_strided_slice %1 {offsets = [1, 0], sizes = [1, 256], strides = [1, 1]} : vector<4x256xf32> to vector<1x256xf32>
    %10 = vector.broadcast %8 : vector<16x1xf32> to vector<16x256xf32>
    %11 = vector.broadcast %9 : vector<1x256xf32> to vector<16x256xf32>
    %12 = arith.mulf %10, %11 : vector<16x256xf32>
    %13 = arith.addf %7, %12 : vector<16x256xf32>
    %14 = vector.extract_strided_slice %2 {offsets = [0, 2], sizes = [16, 1], strides = [1, 1]} : vector<16x4xf32> to vector<16x1xf32>
    %15 = vector.extract_strided_slice %1 {offsets = [2, 0], sizes = [1, 256], strides = [1, 1]} : vector<4x256xf32> to vector<1x256xf32>
    %16 = vector.broadcast %14 : vector<16x1xf32> to vector<16x256xf32>
    %17 = vector.broadcast %15 : vector<1x256xf32> to vector<16x256xf32>
    %18 = arith.mulf %16, %17 : vector<16x256xf32>
    %19 = arith.addf %13, %18 : vector<16x256xf32>
    %20 = vector.extract_strided_slice %2 {offsets = [0, 3], sizes = [16, 1], strides = [1, 1]} : vector<16x4xf32> to vector<16x1xf32>
    %21 = vector.extract_strided_slice %1 {offsets = [3, 0], sizes = [1, 256], strides = [1, 1]} : vector<4x256xf32> to vector<1x256xf32>
    %22 = vector.broadcast %20 : vector<16x1xf32> to vector<16x256xf32>
    %23 = vector.broadcast %21 : vector<1x256xf32> to vector<16x256xf32>
    %24 = arith.mulf %22, %23 : vector<16x256xf32>
    %25 = arith.addf %19, %24 : vector<16x256xf32>
    %c0_4 = arith.constant 0 : index
    %c0_5 = arith.constant 0 : index
    %26 = vector.load %arg4[%c0_4, %c0_5] : memref<16x1xf32, #tpu.memory_space<vmem>>, vector<16x1xf32>
    %27 = vector.broadcast %26 : vector<16x1xf32> to vector<16x256xf32>
    %28 = arith.addf %25, %27 : vector<16x256xf32>
    %29 = arith.negf %28 : vector<16x256xf32>
    %30 = math.exp %29 : vector<16x256xf32>
    %cst = arith.constant 1.000000e+00 : f32
    %31 = vector.broadcast %cst : f32 to vector<16x256xf32>
    %32 = arith.addf %31, %30 : vector<16x256xf32>
    %33 = arith.divf %31, %32 : vector<16x256xf32>
    %34 = arith.mulf %28, %33 : vector<16x256xf32>
    %c0_6 = arith.constant 0 : index
    %c0_7 = arith.constant 0 : index
    %c0_8 = arith.constant 0 : index
    %35 = vector.load %arg5[%c0_6, %c0_7, %c0_8] : memref<1x16x256xf32, #tpu.memory_space<vmem>>, vector<1x16x256xf32>
    %36 = vector.shape_cast %35 : vector<1x16x256xf32> to vector<16x256xf32>
    %37 = vector.shape_cast %34 : vector<16x256xf32> to vector<1x16x256xf32>
    tpu.vector_store %arg5[%c0_6, %c0_7, %c0_8], %37 {strides = array<i32>} : memref<1x16x256xf32, #tpu.memory_space<vmem>>, vector<1x16x256xf32>,
    return
  }
  func.func @transform_0(%arg0: i32, %arg1: i32) -> (i32, i32, i32) {
    %c0_i32 = arith.constant 0 : i32
    %c0_i32_0 = arith.constant 0 : i32
    return %arg0, %c0_i32, %arg1 : i32, i32, i32
  }
  func.func @transform_1(%arg0: i32, %arg1: i32) -> (i32, i32) {
    %c0_i32 = arith.constant 0 : i32
    %c0_i32_0 = arith.constant 0 : i32
    %c0_i32_1 = arith.constant 0 : i32
    return %c0_i32, %c0_i32_0 : i32, i32
  }
  func.func @transform_2(%arg0: i32, %arg1: i32) -> (i32, i32) {
    %c0_i32 = arith.constant 0 : i32
    %c0_i32_0 = arith.constant 0 : i32
    %c0_i32_1 = arith.constant 0 : i32
    return %c0_i32, %c0_i32_0 : i32, i32
  }
  func.func @transform_3(%arg0: i32, %arg1: i32) -> (i32, i32, i32) {
    %c0_i32 = arith.constant 0 : i32
    %c0_i32_0 = arith.constant 0 : i32
    return %arg0, %c0_i32, %arg1 : i32, i32, i32
  }
}

</mosaic_0001>

<llo_original>
// kernel: tpu_custom_call.1
$region0: #{tpu_custom_call.1}
  #allocation0 [shape = 'u32[]', space=smem, size = 0x4, offset = 0x4, fixed_abs, tag = 'smem constant byte address 0x4 - core index']
  #allocation1 [shape = 'u32[144,128]{1,0:T(1,128)}', space=vmem, size = 0x12000, scoped, tag = 'internal scratch']
  %s0 = inlined_call_operand.vmem [shape: f32[2,4,256], index: 0, kind: input, shape index: {}]
  %s1 = inlined_call_operand.vmem [shape: f32[16,4], index: 1, kind: input, shape index: {}]
  %s2 = inlined_call_operand.vmem [shape: f32[16,1], index: 2, kind: input, shape index: {}]
  %s3 = inlined_call_operand.hbm [shape: f32[2,16,256], index: 3, kind: output, shape index: {}]
  %s4 = sld [smem:[#allocation0]]
  $region45: #{tpu_custom_call.1} parent=0
    _
  %s6 = ssub.s32 1, %s4
  %s7 = scalar_select 0, %s6, %s4
  $region1: #{tpu_custom_call.1} parent=0
    #allocation2 [shape = 'u8[32768]{0}', space=vmem, size = 0x8000, scoped, tag = 'output window, operand 0']
    #allocation3 [shape = 's32[2]{0}', space=sflag, size = 0x8, scoped, tag = 'scoped memory for tpu_custom_call.1']
    %8 = vsyncpa [#allocation3], 0
    %s9 = scalar_lea.sflag [#allocation3], 1
    %10 = vsyncpa %s9, 0
    loop: start=0, step=1, limit=4
    $region2: #{tpu_custom_call.1} parent=1 // loop_pre_header
      _
    $region3: #{tpu_custom_call.1} parent=1 // loop_header
      %s12 = sphi 0, %s16
      %p13 = scmp.ge.s32.totalorder %s12, 4
      %s19 = sphi 0, %s31
      %s20 = sphi 0, %s27
      %s21 = sphi 0, %s19
      %s22 = sphi 0, %s20
      %s23 = sphi 0, %s21
      %s24 = sphi 0, %s22
      %s36 = sphi 0, %s38
      %s39 = sphi 0, %s36
      %s40 = sphi 0, %s39
      %s56 = sphi 0, %s40
      %s60 = sphi 0, %s60
      %s62 = sphi 0, %s60
      %s63 = sphi 0, %s62
      %s77 = sphi 0, %s63
      %s81 = sphi 0, %s81
      %s83 = sphi 0, %s81
      %s84 = sphi 0, %s83
      %s98 = sphi 0, %s84
      %s106 = sphi 0, %s108
      %s109 = sphi 0, %s106
      %s110 = sphi 0, %s109
      %s126 = sphi 0, %s110
    $region4: #{tpu_custom_call.1} parent=1 // loop_header_branch
      %15 = sbr.rel (%p13) target = $region8
    $region5: #{tpu_custom_call.1} parent=1 // loop_body
      %s17 = ssub.s32 %s12, 1
      %s18 = ssub.s32 %s12, 2
      %s25 = sadd.s32 1, %s20
      %p26 = scmp.ge.s32.totalorder %s25, 1
      %s27 = scalar_select %p26, 0, %s25
      %s28 = sadd.s32 1, %s19
      %s29 = scalar_select %p26, %s28, %s19
      %p30 = scmp.ge.s32.totalorder %s29, 2
      %s31 = scalar_select %p30, 0, %s29
      %s32 = ssub.s32 %s19, %s31
      %s33 = ssub.s32 %s20, %s27
      %s34 = sor.u32 %s32, %s33
      %p35 = scmp.eq.s32.totalorder %s34, 0
      %s37 = sadd.s32 %s36, 1
      %s38 = scalar_select %p35, %s36, %s37
      %p41 = pneg %p35
      %p42 = scmp.eq.s32.totalorder %s12, 1
      %p43 = por %p41, %p42
      %p44 = scmp.ne.s32.totalorder %s36, %s39
      %p45 = scmp.eq.s32.totalorder %s12, 0
      %p46 = por %p44, %p45
      %p47 = scmp.ne.s32.totalorder %s36, %s39
      %p48 = scmp.eq.s32.totalorder %s17, 1
      %p49 = por %p47, %p48
      %p50 = scmp.ne.s32.totalorder %s39, %s40
      %p51 = scmp.eq.s32.totalorder %s17, 0
      %p52 = por %p50, %p51
      %p53 = scmp.ne.s32.totalorder %s39, %s40
      %p54 = scmp.eq.s32.totalorder %s18, 1
      %p55 = por %p53, %p54
      %p57 = scmp.ne.s32.totalorder %s40, %s56
      %p58 = scmp.eq.s32.totalorder %s18, 0
      %p59 = por %p57, %p58
      %s61 = sadd.s32 %s60, 1
      %p64 = scmp.eq.s32.totalorder %s12, 1
      %p65 = scmp.ne.s32.totalorder %s60, %s62
      %p66 = scmp.eq.s32.totalorder %s12, 0
      %p67 = por %p65, %p66
      %p68 = scmp.ne.s32.totalorder %s60, %s62
      %p69 = scmp.eq.s32.totalorder %s17, 1
      %p70 = por %p68, %p69
      %p71 = scmp.ne.s32.totalorder %s62, %s63
      %p72 = scmp.eq.s32.totalorder %s17, 0
      %p73 = por %p71, %p72
      %p74 = scmp.ne.s32.totalorder %s62, %s63
      %p75 = scmp.eq.s32.totalorder %s18, 1
      %p76 = por %p74, %p75
      %p78 = scmp.ne.s32.totalorder %s63, %s77
      %p79 = scmp.eq.s32.totalorder %s18, 0
      %p80 = por %p78, %p79
      %s82 = sadd.s32 %s81, 1
      %p85 = scmp.eq.s32.totalorder %s12, 1
      %p86 = scmp.ne.s32.totalorder %s81, %s83
      %p87 = scmp.eq.s32.totalorder %s12, 0
      %p88 = por %p86, %p87
      %p89 = scmp.ne.s32.totalorder %s81, %s83
      %p90 = scmp.eq.s32.totalorder %s17, 1
      %p91 = por %p89, %p90
      %p92 = scmp.ne.s32.totalorder %s83, %s84
      %p93 = scmp.eq.s32.totalorder %s17, 0
      %p94 = por %p92, %p93
      %p95 = scmp.ne.s32.totalorder %s83, %s84
      %p96 = scmp.eq.s32.totalorder %s18, 1
      %p97 = por %p95, %p96
      %p99 = scmp.ne.s32.totalorder %s84, %s98
      %p100 = scmp.eq.s32.totalorder %s18, 0
      %p101 = por %p99, %p100
      %s102 = ssub.s32 %s19, %s31
      %s103 = ssub.s32 %s20, %s27
      %s104 = sor.u32 %s102, %s103
      %p105 = scmp.eq.s32.totalorder %s104, 0
      %s107 = sadd.s32 %s106, 1
      %s108 = scalar_select %p105, %s106, %s107
      %p111 = pneg %p105
      %p112 = scmp.eq.s32.totalorder %s12, 1
      %p113 = por %p111, %p112
      %p114 = scmp.ne.s32.totalorder %s106, %s109
      %p115 = scmp.eq.s32.totalorder %s12, 0
      %p116 = por %p114, %p115
      %p117 = scmp.ne.s32.totalorder %s106, %s109
      %p118 = scmp.eq.s32.totalorder %s17, 1
      %p119 = por %p117, %p118
      %p120 = scmp.ne.s32.totalorder %s109, %s110
      %p121 = scmp.eq.s32.totalorder %s17, 0
      %p122 = por %p120, %p121
      %p123 = scmp.ne.s32.totalorder %s109, %s110
      %p124 = scmp.eq.s32.totalorder %s18, 1
      %p125 = por %p123, %p124
      %p127 = scmp.ne.s32.totalorder %s110, %s126
      %p128 = scmp.eq.s32.totalorder %s18, 0
      %p129 = por %p127, %p128
      %p130 = scmp.le.s32.totalorder 1, %s12
      %p131 = scmp.lt.s32.totalorder %s12, 3
      %p132 = pnand %p130, %p131
      %p133 = pneg %p132
      // Predicated region
      $region9: #{tpu_custom_call.1} parent=5 // pred_check
        _
      $region10: #{tpu_custom_call.1} parent=5 // pred_check_branch
        %135 = sbr.rel (%p132) target = $region12
      $region11: #{tpu_custom_call.1} parent=5 // pred_region
        %s136 = ssub.s32 %s12, 1
        // Predicated region
        $region13: #{tpu_custom_call.1} parent=11 // pred_check
          %p137 = pneg %p73
        $region14: #{tpu_custom_call.1} parent=11 // pred_check_branch
          %139 = sbr.rel (%p137) target = $region16
        $region15: #{tpu_custom_call.1} parent=11 // pred_region
          _
        $region16: #{tpu_custom_call.1} parent=11 // pred_fallthru
          _
        // Predicated region
        $region17: #{tpu_custom_call.1} parent=11 // pred_check
          %p140 = pneg %p94
        $region18: #{tpu_custom_call.1} parent=11 // pred_check_branch
          %142 = sbr.rel (%p140) target = $region20
        $region19: #{tpu_custom_call.1} parent=11 // pred_region
          _
        $region20: #{tpu_custom_call.1} parent=11 // pred_fallthru
          _
      $region12: #{tpu_custom_call.1} parent=5 // pred_fallthru
        _
      %p143 = scmp.lt.s32.totalorder %s12, 2
      // Predicated region
      $region21: #{tpu_custom_call.1} parent=5 // pred_check
        %p144 = pneg %p143
      $region22: #{tpu_custom_call.1} parent=5 // pred_check_branch
        %146 = sbr.rel (%p144) target = $region24
      $region23: #{tpu_custom_call.1} parent=5 // pred_region
        // Predicated region
        $region25: #{tpu_custom_call.1} parent=23 // pred_check
          %p147 = pneg %p46
        $region26: #{tpu_custom_call.1} parent=23 // pred_check_branch
          %149 = sbr.rel (%p147) target = $region28
        $region27: #{tpu_custom_call.1} parent=23 // pred_region
          %s150 = smul.u32 2, %s20
          %p151 = scmp.lt.s32.totalorder %s19, 1
          %s152 = scalar_select %p151, %s19, 1
          %p153 = scmp.lt.s32.totalorder %s150, 1
          %s154 = scalar_select %p153, %s150, 1
          %s155 = smul.addr %s152, 2
          %s156 = sadd.s32 %s154, %s155
          %s157 = smul.addr %s156, 4
          %s158 = scalar_lea.vmem %s0, %s157
          %s159 = smul.u32 2, %s20
        $region28: #{tpu_custom_call.1} parent=23 // pred_fallthru
          _
      $region24: #{tpu_custom_call.1} parent=5 // pred_fallthru
        _
      %p160 = scmp.le.s32.totalorder 1, %s12
      %p161 = scmp.lt.s32.totalorder %s12, 3
      %p162 = pnand %p160, %p161
      %p163 = pneg %p162
      // Predicated region
      $region29: #{tpu_custom_call.1} parent=5 // pred_check
        _
      $region30: #{tpu_custom_call.1} parent=5 // pred_check_branch
        %165 = sbr.rel (%p162) target = $region32
      $region31: #{tpu_custom_call.1} parent=5 // pred_region
        %s166 = ssub.s32 %s12, 1
        %s167 = smul.u32 2, %s22
        %p168 = scmp.lt.s32.totalorder %s21, 1
        %s169 = scalar_select %p168, %s21, 1
        %p170 = scmp.lt.s32.totalorder %s167, 1
        %s171 = scalar_select %p170, %s167, 1
        %s172 = smul.addr %s169, 2
        %s173 = sadd.s32 %s171, %s172
        %s174 = smul.addr %s173, 4
        %s175 = scalar_lea.vmem %s0, %s174
        %p176 = pneg %p52
        %p177 = pneg %p49
        %p178 = pneg %p73
        %p179 = pneg %p70
        %p180 = pneg %p94
        %p181 = pneg %p91
        %p182 = pneg %p122
        %p183 = pneg %p119
        %s184 = sand.u32 %s109, 1
        %s185 = scalar_lea.sflag [#allocation3], %s184
        %s186 = sand.u32 %s109, 1
        %s187 = smul.addr %s186, 32
        %s188 = scalar_lea.vmem [#allocation2], %s187
        %s189 = smul.u32 2, %s22
        %p190 = scmp.lt.s32.totalorder %s21, 1
        %s191 = scalar_select %p190, %s21, 1
        %p192 = scmp.lt.s32.totalorder %s189, 1
        %s193 = scalar_select %p192, %s189, 1
        %s194 = smul.addr %s191, 2
        %s195 = sadd.s32 %s193, %s194
        %s196 = smul.addr %s195, 4
        %s197 = scalar_lea.vmem %s0, %s196
        %s198 = smul.u32 2, %s22
        %s199 = smul.u32 2, %s22
        %v200 = vld [vmem:[%s197] sm:$0xff]
        %v201 = vld [vmem:[%s1] sm:$0xff]
        %v202 = vld [vmem:[%s1 + $0x8] sm:$0xff]
        %204 = vset.pattern.permute.xlu0 0
        %205 = vperm.xlu0 %204, %v201
        %v206 = vpop.permute.xlu0 %205
        %209 = vset.pattern.permute.xlu0 0
        %210 = vperm.xlu0 %209, %v202
        %v211 = vpop.permute.xlu0 %210
        %v214 = vlaneseq
        %v215 = vshrl.u32 %v214, 7
        %v216 = vsub.s32 0, %v215
        %v217 = vrot.slane %v200, %v216
        %v218 = vlaneseq
        %v219 = vshrl.u32 %v218, 7
        %v220 = vsub.s32 4, %v219
        %v221 = vrot.slane %v200, %v220
        %v224 = vlaneseq
        %v225 = vshrl.u32 %v224, 7
        %v226 = vsub.s32 0, %v225
        %v227 = vrot.slane %v217, %v226
        %v228 = vlaneseq
        %v229 = vshrl.u32 %v228, 7
        %v230 = vsub.s32 0, %v229
        %v231 = vrot.slane %v221, %v230
        %v232 = vmul.f32 %v206, %v227
        %v233 = vmul.f32 %v206, %v231
        %v234 = vmul.f32 %v211, %v227
        %v235 = vmul.f32 %v211, %v231
        %236 = vset.pattern.permute.xlu0 1
        %237 = vperm.xlu0 %236, %v201
        %v238 = vpop.permute.xlu0 %237
        %240 = vset.pattern.permute.xlu0 1
        %241 = vperm.xlu0 %240, %v202
        %v242 = vpop.permute.xlu0 %241
        %v244 = vlaneseq
        %v245 = vshrl.u32 %v244, 7
        %v246 = vsub.s32 1, %v245
        %v247 = vrot.slane %v200, %v246
        %v248 = vlaneseq
        %v249 = vshrl.u32 %v248, 7
        %v250 = vsub.s32 5, %v249
        %v251 = vrot.slane %v200, %v250
        %v254 = vlaneseq
        %v255 = vshrl.u32 %v254, 7
        %v256 = vsub.s32 1, %v255
        %v257 = vrot.slane %v247, %v256
        %v258 = vlaneseq
        %v259 = vshrl.u32 %v258, 7
        %v260 = vsub.s32 1, %v259
        %v261 = vrot.slane %v251, %v260
        %v262 = vmul.f32 %v238, %v257
        %v263 = vmul.f32 %v238, %v261
        %v264 = vmul.f32 %v242, %v257
        %v265 = vmul.f32 %v242, %v261
        %v266 = vadd.f32 %v232, %v262
        %v267 = vadd.f32 %v233, %v263
        %v268 = vadd.f32 %v234, %v264
        %v269 = vadd.f32 %v235, %v265
        %270 = vset.pattern.permute.xlu0 2
        %271 = vperm.xlu0 %270, %v201
        %v272 = vpop.permute.xlu0 %271
        %274 = vset.pattern.permute.xlu0 2
        %275 = vperm.xlu0 %274, %v202
        %v276 = vpop.permute.xlu0 %275
        %v278 = vlaneseq
        %v279 = vshrl.u32 %v278, 7
        %v280 = vsub.s32 2, %v279
        %v281 = vrot.slane %v200, %v280
        %v282 = vlaneseq
        %v283 = vshrl.u32 %v282, 7
        %v284 = vsub.s32 6, %v283
        %v285 = vrot.slane %v200, %v284
        %v288 = vlaneseq
        %v289 = vshrl.u32 %v288, 7
        %v290 = vsub.s32 2, %v289
        %v291 = vrot.slane %v281, %v290
        %v292 = vlaneseq
        %v293 = vshrl.u32 %v292, 7
        %v294 = vsub.s32 2, %v293
        %v295 = vrot.slane %v285, %v294
        %v296 = vmul.f32 %v272, %v291
        %v297 = vmul.f32 %v272, %v295
        %v298 = vmul.f32 %v276, %v291
        %v299 = vmul.f32 %v276, %v295
        %v300 = vadd.f32 %v266, %v296
        %v301 = vadd.f32 %v267, %v297
        %v302 = vadd.f32 %v268, %v298
        %v303 = vadd.f32 %v269, %v299
        %304 = vset.pattern.permute.xlu0 3
        %305 = vperm.xlu0 %304, %v201
        %v306 = vpop.permute.xlu0 %305
        %308 = vset.pattern.permute.xlu0 3
        %309 = vperm.xlu0 %308, %v202
        %v310 = vpop.permute.xlu0 %309
        %v312 = vlaneseq
        %v313 = vshrl.u32 %v312, 7
        %v314 = vsub.s32 3, %v313
        %v315 = vrot.slane %v200, %v314
        %v316 = vlaneseq
        %v317 = vshrl.u32 %v316, 7
        %v318 = vsub.s32 7, %v317
        %v319 = vrot.slane %v200, %v318
        %v322 = vlaneseq
        %v323 = vshrl.u32 %v322, 7
        %v324 = vsub.s32 3, %v323
        %v325 = vrot.slane %v315, %v324
        %v326 = vlaneseq
        %v327 = vshrl.u32 %v326, 7
        %v328 = vsub.s32 3, %v327
        %v329 = vrot.slane %v319, %v328
        %v330 = vmul.f32 %v306, %v325
        %v331 = vmul.f32 %v306, %v329
        %v332 = vmul.f32 %v310, %v325
        %v333 = vmul.f32 %v310, %v329
        %v334 = vadd.f32 %v300, %v330
        %v335 = vadd.f32 %v301, %v331
        %v336 = vadd.f32 %v302, %v332
        %v337 = vadd.f32 %v303, %v333
        %v338 = vld [vmem:[%s2] sm:$0xff]
        %v339 = vld [vmem:[%s2 + $0x8] sm:$0xff]
        %341 = vset.pattern.permute.xlu0 0
        %342 = vperm.xlu0 %341, %v338
        %v343 = vpop.permute.xlu0 %342
        %346 = vset.pattern.permute.xlu0 0
        %347 = vperm.xlu0 %346, %v339
        %v348 = vpop.permute.xlu0 %347
        %v350 = vadd.f32 %v334, %v343
        %v351 = vadd.f32 %v335, %v343
        %v352 = vadd.f32 %v336, %v348
        %v353 = vadd.f32 %v337, %v348
        %v354 = vxor.u32 %v350, 2147483648
        %v355 = vxor.u32 %v351, 2147483648
        %v356 = vxor.u32 %v352, 2147483648
        %v357 = vxor.u32 %v353, 2147483648
        %v358 = vmul.f32 %v354, 1.442695
        %v359 = vpow.pop %v358
        %v360 = vmul.f32 %v355, 1.442695
        %v361 = vpow.pop %v360
        %v362 = vmul.f32 %v356, 1.442695
        %v363 = vpow.pop %v362
        %v364 = vmul.f32 %v357, 1.442695
        %v365 = vpow.pop %v364
        %v366 = vadd.f32 %v359, 1.0
        %v367 = vadd.f32 %v361, 1.0
        %v368 = vadd.f32 %v363, 1.0
        %v369 = vadd.f32 %v365, 1.0
        %v370 = vrcp.pop %v366
        %v371 = vmul.f32 1.0, %v370
        %v372 = vrcp.pop %v367
        %v373 = vmul.f32 1.0, %v372
        %v374 = vrcp.pop %v368
        %v375 = vmul.f32 1.0, %v374
        %v376 = vrcp.pop %v369
        %v377 = vmul.f32 1.0, %v376
        %v378 = vmul.f32 %v350, %v371
        %v379 = vmul.f32 %v351, %v373
        %v380 = vmul.f32 %v352, %v375
        %v381 = vmul.f32 %v353, %v377
        %382 = vst [vmem:[%s188] sm:$0xff] %v378
        %383 = vst [vmem:[%s188 + $0x8] sm:$0xff] %v379
        %384 = vst [vmem:[%s188 + $0x10] sm:$0xff] %v380
        %385 = vst [vmem:[%s188 + $0x18] sm:$0xff] %v381
        %s386 = sand.u32 %s109, 1
        %s387 = scalar_lea.sflag [#allocation3], %s386
        %s388 = sand.u32 %s109, 1
        %s389 = smul.addr %s388, 32
        %s390 = scalar_lea.vmem [#allocation2], %s389
        // Predicated region
        $region33: #{tpu_custom_call.1} parent=31 // pred_check
          %p391 = pneg %p119
        $region34: #{tpu_custom_call.1} parent=31 // pred_check_branch
          %393 = sbr.rel (%p391) target = $region36
        $region35: #{tpu_custom_call.1} parent=31 // pred_region
          %s394 = smul.u32 2, %s22
          %s396 = ssub.s32 512, 512
          %397 = vsyncadd %s387, %s396
          %s398 = smul.addr %s21, 4
          %s399 = sadd.s32 %s394, %s398
          %s400 = smul.addr %s399, 128
          %s401 = scalar_lea.hbm %s3, %s400
          %s402 = sshll.u32 %s390, 4
          %s403 = int_to_ptr.vmem [resolvable:$true] %s402
          %408 = dma.vmem_to_hbm [thread:$0]  %s403, 512, %s401, %s387, 256, 256, 16
        $region36: #{tpu_custom_call.1} parent=31 // pred_fallthru
          _
      $region32: #{tpu_custom_call.1} parent=5 // pred_fallthru
        _
      %p409 = scmp.le.s32.totalorder 2, %s12
      // Predicated region
      $region37: #{tpu_custom_call.1} parent=5 // pred_check
        %p410 = pneg %p409
      $region38: #{tpu_custom_call.1} parent=5 // pred_check_branch
        %412 = sbr.rel (%p410) target = $region40
      $region39: #{tpu_custom_call.1} parent=5 // pred_region
        %s413 = ssub.s32 %s12, 2
        // Predicated region
        $region41: #{tpu_custom_call.1} parent=39 // pred_check
          %p414 = pneg %p125
        $region42: #{tpu_custom_call.1} parent=39 // pred_check_branch
          %416 = sbr.rel (%p414) target = $region44
        $region43: #{tpu_custom_call.1} parent=39 // pred_region
          %s417 = sand.u32 %s110, 1
          %s418 = scalar_lea.sflag [#allocation3], %s417
          %s419 = sand.u32 %s110, 1
          %s420 = smul.addr %s419, 32
          %s421 = scalar_lea.vmem [#allocation2], %s420
          %422 = dma.done %s418, 512
        $region44: #{tpu_custom_call.1} parent=39 // pred_fallthru
          _
      $region40: #{tpu_custom_call.1} parent=5 // pred_fallthru
        _
    $region6: #{tpu_custom_call.1} parent=1 // loop_footer
      %s16 = sadd.s32 1, %s12
    $region7: #{tpu_custom_call.1} parent=1 // loop_footer_branch
      %11 = sbr.rel target = $region3
    $region8: #{tpu_custom_call.1} parent=1 // loop_exit
      _
    %423 = vsyncpa [#allocation3], 1
    %s424 = scalar_lea.sflag [#allocation3], 1
    %425 = vsyncpa %s424, 1

</llo_original>
